<compile_context>
chip_gen: v7x
topology: tpu7x:2x2x1
jax: 0.10.0
libtpu: 0.0.40
codegen_flags: <defaults>
</compile_context>

<pallas_src>
import functools

import jax
import jax.numpy as jnp
from jax import lax
from jax.experimental import pallas as pl
from jax.experimental.pallas import tpu as pltpu


def _ntxent_kernel(zr_ref, zc_ref, out_ref, l_ref, pos_ref, *,
                   tm, tk, n_valid, m_valid, inv_t, eps):
    # zr_ref : (tm, d) unit-norm rows, pre-scaled by 1/T (resident across k)
    # zc_ref : (tk, d) unit-norm columns (re-streamed over k)
    # out_ref: (1, tm) per-sample loss (written on the last column step)
    # l_ref  : (1, tm) scratch - running sum of exp(logits - 1/T)
    # pos_ref: (1, tm) scratch - positive-pair logit per row
    i = pl.program_id(0)                 # row-tile index ("parallel")
    k = pl.program_id(1)                 # col-tile index ("arbitrary")
    nk = pl.num_programs(1)

    r0 = i * tm
    c0 = k * tk
    r1 = r0 + tm
    c1 = c0 + tk

    @pl.when(k == 0)
    def _init():
        l_ref[...] = jnp.zeros(l_ref.shape, jnp.float32)
        pos_ref[...] = jnp.zeros(pos_ref.shape, jnp.float32)

    # (tk, tm) scaled-similarity block: element [c, r] = <z_col[c], z_row[r]>/T.
    # Rows live on the lane axis so per-row reductions are lane-dense (1, tm).
    sim_s = lax.dot_general(zc_ref[...], zr_ref[...],
                            dimension_numbers=(((1,), (1,)), ((), ())),
                            preferred_element_type=jnp.float32)
    clip_hi = (1.0 - eps) * inv_t
    logits = jnp.minimum(jnp.abs(sim_s), clip_hi)   # == clip(|sim|, 1-eps) / T
    # Constant logsumexp shift (logits <= 1/T): no running max, no rescale.
    e = jnp.exp(logits - inv_t)

    diag_crosses = jnp.logical_and(c0 < r1, c1 > r0)
    has_pad_cols = c1 > m_valid
    needs_mask = jnp.logical_or(diag_crosses, has_pad_cols)

    @pl.when(jnp.logical_not(needs_mask))
    def _accum_plain():
        l_ref[...] += jnp.sum(e, axis=0, keepdims=True)

    @pl.when(needs_mask)
    def _accum_masked():
        col_g = lax.broadcasted_iota(jnp.int32, (tk, tm), 0) + c0
        row_g = lax.broadcasted_iota(jnp.int32, (tk, tm), 1) + r0
        keep = jnp.logical_and(col_g != row_g, col_g < m_valid)
        l_ref[...] += jnp.sum(jnp.where(keep, e, 0.0), axis=0, keepdims=True)

    # Positive pair sim[r, r +/- N] is an (unmasked, valid) entry of this
    # logits tile for only a few (i, k): extract it there instead of carrying
    # a separate partner input.
    a_hit = jnp.logical_and(
        r0 < n_valid,
        jnp.logical_and(c0 < jnp.minimum(r1, n_valid) + n_valid,
                        c1 > r0 + n_valid))
    b_hit = jnp.logical_and(
        jnp.logical_and(r1 > n_valid, r0 < m_valid),
        jnp.logical_and(c0 < jnp.minimum(r1, m_valid) - n_valid,
                        c1 > jnp.maximum(r0, n_valid) - n_valid))

    @pl.when(jnp.logical_or(a_hit, b_hit))
    def _grab_positive():
        col_g = lax.broadcasted_iota(jnp.int32, (tk, tm), 0) + c0
        row_g = lax.broadcasted_iota(jnp.int32, (tk, tm), 1) + r0
        poff = jnp.where(row_g < n_valid, n_valid, -n_valid)
        is_pos = col_g == (row_g + poff)
        pos_ref[...] += jnp.sum(jnp.where(is_pos, logits, 0.0),
                                axis=0, keepdims=True)

    @pl.when(k == nk - 1)
    def _finalize():
        lse = inv_t + jnp.log(l_ref[...])
        out_ref[...] = lse - pos_ref[...]     # = -pos/T + logsumexp


def _round_up(x, a):
    return ((x + a - 1) // a) * a


def _select_tiles(m, d, vmem_limit_bytes):
    """Pick (tm, tk, m_pad).  tm/tk are power-of-two multiples of 128 so the
    padded problem size is a multiple of both.  tm (row-tile height) is the
    primary arithmetic-intensity lever; tk grows toward full column residency
    when VMEM allows."""
    lim = 2 * _round_up(m, 128)
    tm_cands = [t for t in (1024, 512, 256, 128) if t < lim or t == 128]
    tk_cands = [t for t in (4096, 2048, 1024, 512, 256, 128) if t < lim or t == 128]
    usable = int(vmem_limit_bytes * 0.6)       # headroom for compiler temps
    for tm in tm_cands:
        for tk in tk_cands:
            need = 4 * (2 * tm * d             # row tile   (double-buffered)
                        + 2 * tk * d           # column tile (double-buffered)
                        + 8 * tm * tk)         # sim/exp/mask live temporaries
            if need <= usable:
                m_pad = _round_up(m, max(tm, tk))
                # Keep >= 2 row tiles so the "parallel" axis can load-balance
                # across both TensorCores on 2-TC parts (v7x).
                while tm > 128 and m_pad // tm < 2:
                    tm //= 2
                    m_pad = _round_up(m, max(tm, tk))
                return tm, tk, m_pad
    return 128, 128, _round_up(m, 128)


def ntxent_loss(z1, z2, temperature=0.1, eps=1e-6, use_bf16_matmul=False):
    """NT-Xent loss.  z1, z2: (N, D) float32.  Returns a scalar float32."""
    n, d = z1.shape
    assert z2.shape == (n, d)
    m = 2 * n
    inv_t = 1.0 / float(temperature)

    # Normalize once in the wrapper (O(m*d); the kernel never re-normalizes).
    z = jnp.concatenate([z1, z2], axis=0).astype(jnp.float32)
    norm = jnp.maximum(jnp.linalg.norm(z, axis=1, keepdims=True), eps)
    zn = z / norm

    # Generation-aware VMEM budget (v5e/v6e 128 MiB, v7x 64 MiB physical).
    try:
        vmem_cap = int(pltpu.get_tpu_info().vmem_capacity_bytes)
    except Exception:
        vmem_cap = 64 * 1024 * 1024
    vmem_limit = min(int(vmem_cap * 0.8), 110 * 1024 * 1024)

    tm, tk, m_pad = _select_tiles(m, d, vmem_limit)
    nrt, nct = m_pad // tm, m_pad // tk

    pad = m_pad - m
    if pad:
        zn = jnp.pad(zn, ((0, pad), (0, 0)))   # padded rows are exact zeros
    zrs = zn * inv_t                           # pre-scaled rows -> MXU emits logits
    if use_bf16_matmul:
        # Optional: ~1e-3 similarity error; keep off for tight tolerances.
        zrs = zrs.astype(jnp.bfloat16)
        zn = zn.astype(jnp.bfloat16)

    kernel = functools.partial(
        _ntxent_kernel, tm=tm, tk=tk, n_valid=n, m_valid=m,
        inv_t=inv_t, eps=float(eps))

    cost = pl.CostEstimate(
        flops=2 * m_pad * m_pad * d,
        transcendentals=m_pad * m_pad + m_pad,
        bytes_accessed=4 * (nrt * m_pad * d + m_pad * d + m_pad))

    out = pl.pallas_call(
        kernel,
        out_shape=jax.ShapeDtypeStruct((1, m_pad), jnp.float32),
        grid_spec=pltpu.PrefetchScalarGridSpec(
            num_scalar_prefetch=0,
            grid=(nrt, nct),
            in_specs=[
                pl.BlockSpec((tm, d), lambda i, k: (i, 0)),   # rows (resident)
                pl.BlockSpec((tk, d), lambda i, k: (k, 0)),   # cols (streamed)
            ],
            out_specs=pl.BlockSpec((1, tm), lambda i, k: (0, i)),
            scratch_shapes=[
                pltpu.VMEM((1, tm), jnp.float32),   # running sum of exp
                pltpu.VMEM((1, tm), jnp.float32),   # positive logit per row
            ],
        ),
        compiler_params=pltpu.CompilerParams(
            dimension_semantics=("parallel", "arbitrary"),
            vmem_limit_bytes=vmem_limit),
        cost_estimate=cost,
    )(zrs, zn)

    # Tiny final reduction (mean over the 2N valid samples) in the wrapper.
    return jnp.mean(out[0, :m])


def _ntxent_ref(z1, z2, temperature=0.1, eps=1e-6):
    # Pure-JAX reference mirroring the PyTorch forward (real inputs).
    z = jnp.concatenate([z1, z2], axis=0)
    norm = jnp.maximum(jnp.linalg.norm(z, axis=1, keepdims=True), eps)
    zn = z / norm
    sim = jnp.clip(jnp.abs(zn @ zn.T), -1 + eps, 1 - eps)
    n = z1.shape[0]
    idx = jnp.arange(n)
    pos = jnp.concatenate([sim[idx, idx + n], sim[idx + n, idx]])[:, None]
    m2 = 2 * n
    logits = jnp.where(jnp.eye(m2, dtype=bool), -jnp.inf, sim / temperature)
    lse = jax.scipy.special.logsumexp(logits, axis=1, keepdims=True)
    return jnp.mean(-pos / temperature + lse)


if __name__ == "__main__":
    key = jax.random.PRNGKey(0)

    # Small smoke test (module-sized inputs).
    k1, k2 = jax.random.split(key)
    N, D = 8, 32
    z1 = jax.random.normal(k1, (N, D), dtype=jnp.float32)
    z2 = jax.random.normal(k2, (N, D), dtype=jnp.float32)
    loss = ntxent_loss(z1, z2)
    jax.block_until_ready(loss)
    ref = _ntxent_ref(z1, z2)
    assert jnp.allclose(loss, ref, rtol=1e-5, atol=3e-5), (loss, ref)

    # A larger, awkwardly-sized batch (not a multiple of the tile size):
    # exercises end-padding with in-kernel column masking, the gated diagonal
    # mask, the gated positive extraction across the z1/z2 boundary, and the
    # unmasked fast path.
    k3, k4 = jax.random.split(k1)
    N2, D2 = 2200, 32
    z1b = jax.random.normal(k3, (N2, D2), dtype=jnp.float32)
    z2b = jax.random.normal(k4, (N2, D2), dtype=jnp.float32)
    loss_b = ntxent_loss(z1b, z2b)
    jax.block_until_ready(loss_b)
    ref_b = _ntxent_ref(z1b, z2b)
    assert jnp.allclose(loss_b, ref_b, rtol=1e-4, atol=1e-4), (loss_b, ref_b)

    print("KERNEL_OK")
</pallas_src>

<mosaic_0001>
module attributes {stable_mosaic.version = 11 : i64} {
  func.func @_ntxent_kernel(%arg0: i32, %arg1: i32, %arg2: memref<128x32xf32, #tpu.memory_space<vmem>>, %arg3: memref<128x32xf32, #tpu.memory_space<vmem>>, %arg4: memref<1x128xf32, #tpu.memory_space<vmem>>, %arg5: memref<1x128xf32, #tpu.memory_space<vmem>>, %arg6: memref<1x128xf32, #tpu.memory_space<vmem>>) attributes {dimension_semantics = [#tpu.dimension_semantics<parallel>, #tpu.dimension_semantics<arbitrary>], iteration_bounds = array<i64: 1, 1>, scalar_prefetch = 0 : i64, scratch_operands = 2 : i64, tpu.core_type = #tpu.core_type<tc>, window_params = [{transform_indices = @transform_0, window_bounds = array<i64: 128, 32>}, {transform_indices = @transform_1, window_bounds = array<i64: 128, 32>}, {transform_indices = @transform_2, window_bounds = array<i64: 1, 128>}]} {
    %c128_i32 = arith.constant 128 : i32
    %0 = arith.muli %arg0, %c128_i32 : i32
    %c128_i32_0 = arith.constant 128 : i32
    %1 = arith.muli %arg1, %c128_i32_0 : i32
    %c128_i32_1 = arith.constant 128 : i32
    %2 = arith.addi %0, %c128_i32_1 : i32
    %c128_i32_2 = arith.constant 128 : i32
    %3 = arith.addi %1, %c128_i32_2 : i32
    %c0_i32 = arith.constant 0 : i32
    %4 = arith.cmpi eq, %arg1, %c0_i32 : i32
    %5 = arith.extui %4 : i1 to i32
    %c0_i32_3 = arith.constant 0 : i32
    %6 = arith.cmpi ne, %5, %c0_i32_3 : i32
    scf.if %6 {
      %cst_23 = arith.constant 0.000000e+00 : f32
      %51 = vector.broadcast %cst_23 : f32 to vector<1x128xf32>
      %c0_24 = arith.constant 0 : index
      %c0_25 = arith.constant 0 : index
      %52 = vector.load %arg5[%c0_24, %c0_25] : memref<1x128xf32, #tpu.memory_space<vmem>>, vector<1x128xf32>
      tpu.vector_store %arg5[%c0_24, %c0_25], %51 {strides = array<i32>} : memref<1x128xf32, #tpu.memory_space<vmem>>, vector<1x128xf32>,
      %cst_26 = arith.constant 0.000000e+00 : f32
      %53 = vector.broadcast %cst_26 : f32 to vector<1x128xf32>
      %c0_27 = arith.constant 0 : index
      %c0_28 = arith.constant 0 : index
      %54 = vector.load %arg6[%c0_27, %c0_28] : memref<1x128xf32, #tpu.memory_space<vmem>>, vector<1x128xf32>
      tpu.vector_store %arg6[%c0_27, %c0_28], %53 {strides = array<i32>} : memref<1x128xf32, #tpu.memory_space<vmem>>, vector<1x128xf32>,
    } else {
    }
    %c0 = arith.constant 0 : index
    %c0_4 = arith.constant 0 : index
    %7 = vector.load %arg3[%c0, %c0_4] : memref<128x32xf32, #tpu.memory_space<vmem>>, vector<128x32xf32>
    %c0_5 = arith.constant 0 : index
    %c0_6 = arith.constant 0 : index
    %8 = vector.load %arg2[%c0_5, %c0_6] : memref<128x32xf32, #tpu.memory_space<vmem>>, vector<128x32xf32>
    %cst = arith.constant dense<0.000000e+00> : vector<128x128xf32>
    %9 = tpu.matmul %7, %8, %cst {dimension_numbers = #tpu.dot_dimension_numbers<[1], [1], [0], [0], [0, 0, 1, 0], [], []>} : vector<128x32xf32>, vector<128x32xf32>, vector<128x128xf32> -> vector<128x128xf32>
    %10 = math.absf %9 : vector<128x128xf32>
    %cst_7 = arith.constant 9.999990e+00 : f32
    %11 = vector.broadcast %cst_7 : f32 to vector<128x128xf32>
    %12 = arith.minimumf %10, %11 : vector<128x128xf32>
    %cst_8 = arith.constant 1.000000e+01 : f32
    %13 = vector.broadcast %cst_8 : f32 to vector<128x128xf32>
    %14 = arith.subf %12, %13 : vector<128x128xf32>
    %15 = math.exp %14 : vector<128x128xf32>
    %16 = arith.cmpi slt, %1, %2 : i32
    %17 = arith.cmpi sgt, %3, %0 : i32
    %18 = arith.andi %16, %17 : i1
    %c16_i32 = arith.constant 16 : i32
    %19 = arith.cmpi sgt, %3, %c16_i32 : i32
    %20 = arith.ori %18, %19 : i1
    %true = arith.constant true
    %21 = arith.xori %20, %true : i1
    %22 = arith.extui %21 : i1 to i32
    %c0_i32_9 = arith.constant 0 : i32
    %23 = arith.cmpi ne, %22, %c0_i32_9 : i32
    scf.if %23 {
      %c0_23 = arith.constant 0 : index
      %c0_24 = arith.constant 0 : index
      %51 = vector.load %arg5[%c0_23, %c0_24] : memref<1x128xf32, #tpu.memory_space<vmem>>, vector<1x128xf32>
      %cst_25 = arith.constant dense<0.000000e+00> : vector<128xf32>
      %52 = vector.multi_reduction <add>, %15, %cst_25 [0] : vector<128x128xf32> to vector<128xf32>
      %53 = vector.shape_cast %52 : vector<128xf32> to vector<1x128xf32>
      %54 = arith.addf %51, %53 : vector<1x128xf32>
      %c0_26 = arith.constant 0 : index
      %c0_27 = arith.constant 0 : index
      %55 = vector.load %arg5[%c0_26, %c0_27] : memref<1x128xf32, #tpu.memory_space<vmem>>, vector<1x128xf32>
      tpu.vector_store %arg5[%c0_26, %c0_27], %54 {strides = array<i32>} : memref<1x128xf32, #tpu.memory_space<vmem>>, vector<1x128xf32>,
    } else {
    }
    %24 = arith.extui %20 : i1 to i32
    %c0_i32_10 = arith.constant 0 : i32
    %25 = arith.cmpi ne, %24, %c0_i32_10 : i32
    scf.if %25 {
      %51 = tpu.iota {dimensions = array<i32: 0>} : vector<128x128xi32>
      %52 = vector.broadcast %1 : i32 to vector<128x128xi32>
      %53 = arith.addi %51, %52 : vector<128x128xi32>
      %54 = tpu.iota {dimensions = array<i32: 1>} : vector<128x128xi32>
      %55 = vector.broadcast %0 : i32 to vector<128x128xi32>
      %56 = arith.addi %54, %55 : vector<128x128xi32>
      %57 = arith.cmpi ne, %53, %56 : vector<128x128xi32>
      %c16_i32_23 = arith.constant 16 : i32
      %58 = vector.broadcast %c16_i32_23 : i32 to vector<128x128xi32>
      %59 = arith.cmpi slt, %53, %58 : vector<128x128xi32>
      %60 = arith.andi %57, %59 : vector<128x128xi1>
      %c0_24 = arith.constant 0 : index
      %c0_25 = arith.constant 0 : index
      %61 = vector.load %arg5[%c0_24, %c0_25] : memref<1x128xf32, #tpu.memory_space<vmem>>, vector<1x128xf32>
      %cst_26 = arith.constant 0.000000e+00 : f32
      %62 = vector.broadcast %cst_26 : f32 to vector<128x128xf32>
      %63 = arith.select %60, %15, %62 : vector<128x128xi1>, vector<128x128xf32>
      %cst_27 = arith.constant dense<0.000000e+00> : vector<128xf32>
      %64 = vector.multi_reduction <add>, %63, %cst_27 [0] : vector<128x128xf32> to vector<128xf32>
      %65 = vector.shape_cast %64 : vector<128xf32> to vector<1x128xf32>
      %66 = arith.addf %61, %65 : vector<1x128xf32>
      %c0_28 = arith.constant 0 : index
      %c0_29 = arith.constant 0 : index
      %67 = vector.load %arg5[%c0_28, %c0_29] : memref<1x128xf32, #tpu.memory_space<vmem>>, vector<1x128xf32>
      tpu.vector_store %arg5[%c0_28, %c0_29], %66 {strides = array<i32>} : memref<1x128xf32, #tpu.memory_space<vmem>>, vector<1x128xf32>,
    } else {
    }
    %c8_i32 = arith.constant 8 : i32
    %26 = arith.cmpi slt, %0, %c8_i32 : i32
    %c8_i32_11 = arith.constant 8 : i32
    %27 = arith.minsi %2, %c8_i32_11 : i32
    %c8_i32_12 = arith.constant 8 : i32
    %28 = arith.addi %27, %c8_i32_12 : i32
    %29 = arith.cmpi slt, %1, %28 : i32
    %c8_i32_13 = arith.constant 8 : i32
    %30 = arith.addi %0, %c8_i32_13 : i32
    %31 = arith.cmpi sgt, %3, %30 : i32
    %32 = arith.andi %29, %31 : i1
    %33 = arith.andi %26, %32 : i1
    %c8_i32_14 = arith.constant 8 : i32
    %34 = arith.cmpi sgt, %2, %c8_i32_14 : i32
    %c16_i32_15 = arith.constant 16 : i32
    %35 = arith.cmpi slt, %0, %c16_i32_15 : i32
    %36 = arith.andi %34, %35 : i1
    %c16_i32_16 = arith.constant 16 : i32
    %37 = arith.minsi %2, %c16_i32_16 : i32
    %c8_i32_17 = arith.constant 8 : i32
    %38 = arith.subi %37, %c8_i32_17 : i32
    %39 = arith.cmpi slt, %1, %38 : i32
    %c8_i32_18 = arith.constant 8 : i32
    %40 = arith.maxsi %0, %c8_i32_18 : i32
    %c8_i32_19 = arith.constant 8 : i32
    %41 = arith.subi %40, %c8_i32_19 : i32
    %42 = arith.cmpi sgt, %3, %41 : i32
    %43 = arith.andi %39, %42 : i1
    %44 = arith.andi %36, %43 : i1
    %45 = arith.ori %33, %44 : i1
    %46 = arith.extui %45 : i1 to i32
    %c0_i32_20 = arith.constant 0 : i32
    %47 = arith.cmpi ne, %46, %c0_i32_20 : i32
    scf.if %47 {
      %51 = tpu.iota {dimensions = array<i32: 0>} : vector<128x128xi32>
      %52 = vector.broadcast %1 : i32 to vector<128x128xi32>
      %53 = arith.addi %51, %52 : vector<128x128xi32>
      %54 = tpu.iota {dimensions = array<i32: 1>} : vector<128x128xi32>
      %55 = vector.broadcast %0 : i32 to vector<128x128xi32>
      %56 = arith.addi %54, %55 : vector<128x128xi32>
      %c8_i32_23 = arith.constant 8 : i32
      %57 = vector.broadcast %c8_i32_23 : i32 to vector<128x128xi32>
      %58 = arith.cmpi slt, %56, %57 : vector<128x128xi32>
      %c8_i32_24 = arith.constant 8 : i32
      %c-8_i32 = arith.constant -8 : i32
      %59 = vector.broadcast %c8_i32_24 : i32 to vector<128x128xi32>
      %60 = vector.broadcast %c-8_i32 : i32 to vector<128x128xi32>
      %61 = arith.select %58, %59, %60 : vector<128x128xi1>, vector<128x128xi32>
      %62 = arith.addi %56, %61 : vector<128x128xi32>
      %63 = arith.cmpi eq, %53, %62 : vector<128x128xi32>
      %c0_25 = arith.constant 0 : index
      %c0_26 = arith.constant 0 : index
      %64 = vector.load %arg6[%c0_25, %c0_26] : memref<1x128xf32, #tpu.memory_space<vmem>>, vector<1x128xf32>
      %cst_27 = arith.constant 0.000000e+00 : f32
      %65 = vector.broadcast %cst_27 : f32 to vector<128x128xf32>
      %66 = arith.select %63, %12, %65 : vector<128x128xi1>, vector<128x128xf32>
      %cst_28 = arith.constant dense<0.000000e+00> : vector<128xf32>
      %67 = vector.multi_reduction <add>, %66, %cst_28 [0] : vector<128x128xf32> to vector<128xf32>
      %68 = vector.shape_cast %67 : vector<128xf32> to vector<1x128xf32>
      %69 = arith.addf %64, %68 : vector<1x128xf32>
      %c0_29 = arith.constant 0 : index
      %c0_30 = arith.constant 0 : index
      %70 = vector.load %arg6[%c0_29, %c0_30] : memref<1x128xf32, #tpu.memory_space<vmem>>, vector<1x128xf32>
      tpu.vector_store %arg6[%c0_29, %c0_30], %69 {strides = array<i32>} : memref<1x128xf32, #tpu.memory_space<vmem>>, vector<1x128xf32>,
    } else {
    }
    %c0_i32_21 = arith.constant 0 : i32
    %48 = arith.cmpi eq, %arg1, %c0_i32_21 : i32
    %49 = arith.extui %48 : i1 to i32
    %c0_i32_22 = arith.constant 0 : i32
    %50 = arith.cmpi ne, %49, %c0_i32_22 : i32
    scf.if %50 {
      %c0_23 = arith.constant 0 : index
      %c0_24 = arith.constant 0 : index
      %51 = vector.load %arg5[%c0_23, %c0_24] : memref<1x128xf32, #tpu.memory_space<vmem>>, vector<1x128xf32>
      %52 = math.log %51 : vector<1x128xf32>
      %cst_25 = arith.constant 1.000000e+01 : f32
      %53 = vector.broadcast %cst_25 : f32 to vector<1x128xf32>
      %54 = arith.addf %53, %52 : vector<1x128xf32>
      %c0_26 = arith.constant 0 : index
      %c0_27 = arith.constant 0 : index
      %55 = vector.load %arg6[%c0_26, %c0_27] : memref<1x128xf32, #tpu.memory_space<vmem>>, vector<1x128xf32>
      %56 = arith.subf %54, %55 : vector<1x128xf32>
      %c0_28 = arith.constant 0 : index
      %c0_29 = arith.constant 0 : index
      %57 = vector.load %arg4[%c0_28, %c0_29] : memref<1x128xf32, #tpu.memory_space<vmem>>, vector<1x128xf32>
      tpu.vector_store %arg4[%c0_28, %c0_29], %56 {strides = array<i32>} : memref<1x128xf32, #tpu.memory_space<vmem>>, vector<1x128xf32>,
    } else {
    }
    return
  }
  func.func @transform_0(%arg0: i32, %arg1: i32) -> (i32, i32) {
    %c0_i32 = arith.constant 0 : i32
    %c0_i32_0 = arith.constant 0 : i32
    return %arg0, %c0_i32 : i32, i32
  }
  func.func @transform_1(%arg0: i32, %arg1: i32) -> (i32, i32) {
    %c0_i32 = arith.constant 0 : i32
    %c0_i32_0 = arith.constant 0 : i32
    return %arg1, %c0_i32 : i32, i32
  }
  func.func @transform_2(%arg0: i32, %arg1: i32) -> (i32, i32) {
    %c0_i32 = arith.constant 0 : i32
    %c0_i32_0 = arith.constant 0 : i32
    return %c0_i32, %arg0 : i32, i32
  }
}

</mosaic_0001>

<llo_original>
// kernel: tpu_custom_call.1
$region0: #{tpu_custom_call.1}
  #allocation0 [shape = 'u32[]', space=smem, size = 0x4, offset = 0x4, fixed_abs, tag = 'smem constant byte address 0x4 - core index']
  #allocation1 [shape = 'u32[144,128]{1,0:T(1,128)}', space=vmem, size = 0x12000, scoped, tag = 'internal scratch']
  #allocation2 [shape = 'f32[1,128]{1,0:T(1,128)}', space=vmem, size = 0x200, scoped, tag = 'scratch operand']
  #allocation3 [shape = 'f32[1,128]{1,0:T(1,128)}', space=vmem, size = 0x200, scoped, tag = 'scratch operand']
  %s0 = inlined_call_operand.vmem [shape: f32[128,32], index: 0, kind: input, shape index: {}]
  %s1 = inlined_call_operand.vmem [shape: f32[128,32], index: 1, kind: input, shape index: {}]
  %s2 = inlined_call_operand.hbm [shape: f32[1,128], index: 2, kind: output, shape index: {}]
  %s3 = sld [smem:[#allocation0]]
  $region38: #{tpu_custom_call.1} parent=0
    _
  %s5 = ssub.s32 1, %s3
  %s6 = scalar_select 0, %s5, %s3
  $region1: #{tpu_custom_call.1} parent=0
    #allocation4 [shape = 'u8[512]{0}', space=vmem, size = 0x400, scoped, tag = 'output window, operand 0, single buffered']
    #allocation5 [shape = 's32[1]{0}', space=sflag, size = 0x4, scoped, tag = 'scoped memory for tpu_custom_call.1']
    %7 = vsyncpa [#allocation5], 0
    // Predicated region
    $region2: #{tpu_custom_call.1} parent=1 // pred_check
      _
    $region3: #{tpu_custom_call.1} parent=1 // pred_check_branch
      %9 = sbr.rel (0) target = $region5
    $region4: #{tpu_custom_call.1} parent=1 // pred_region
      _
    $region5: #{tpu_custom_call.1} parent=1 // pred_fallthru
      _
    // Predicated region
    $region6: #{tpu_custom_call.1} parent=1 // pred_check
      _
    $region7: #{tpu_custom_call.1} parent=1 // pred_check_branch
      %11 = sbr.rel (0) target = $region9
    $region8: #{tpu_custom_call.1} parent=1 // pred_region
      _
    $region9: #{tpu_custom_call.1} parent=1 // pred_fallthru
      _
    %s12 = smul.u32 0, 128
    %s13 = smul.u32 0, 128
    %s14 = sadd.s32 %s12, 128
    %s15 = sadd.s32 %s13, 128
    %p16 = scmp.eq.s32.totalorder 0, 0
    // Predicated region
    $region10: #{tpu_custom_call.1} parent=1 // pred_check
      %p17 = pneg %p16
    $region11: #{tpu_custom_call.1} parent=1 // pred_check_branch
      %19 = sbr.rel (%p17) target = $region13
    $region12: #{tpu_custom_call.1} parent=1 // pred_region
      %20 = vst [vmem:[#allocation2] sm:$0x1] 0.0
      %21 = vst [vmem:[#allocation3] sm:$0x1] 0.0
    $region13: #{tpu_custom_call.1} parent=1 // pred_fallthru
      _
    %v22 = vld [vmem:[%s1] sm:$0xff]
    %v23 = vld [vmem:[%s1 + $0x8] sm:$0xff]
    %v24 = vld [vmem:[%s1 + $0x10] sm:$0xff]
    %v25 = vld [vmem:[%s1 + $0x18] sm:$0xff]
    %v26 = vld [vmem:[%s1 + $0x20] sm:$0xff]
    %v27 = vld [vmem:[%s1 + $0x28] sm:$0xff]
    %v28 = vld [vmem:[%s1 + $0x30] sm:$0xff]
    %v29 = vld [vmem:[%s1 + $0x38] sm:$0xff]
    %v30 = vld [vmem:[%s1 + $0x40] sm:$0xff]
    %v31 = vld [vmem:[%s1 + $0x48] sm:$0xff]
    %v32 = vld [vmem:[%s1 + $0x50] sm:$0xff]
    %v33 = vld [vmem:[%s1 + $0x58] sm:$0xff]
    %v34 = vld [vmem:[%s1 + $0x60] sm:$0xff]
    %v35 = vld [vmem:[%s1 + $0x68] sm:$0xff]
    %v36 = vld [vmem:[%s1 + $0x70] sm:$0xff]
    %v37 = vld [vmem:[%s1 + $0x78] sm:$0xff]
    %v38 = vld [vmem:[%s0] sm:$0xff]
    %v39 = vld [vmem:[%s0 + $0x8] sm:$0xff]
    %v40 = vld [vmem:[%s0 + $0x10] sm:$0xff]
    %v41 = vld [vmem:[%s0 + $0x18] sm:$0xff]
    %v42 = vld [vmem:[%s0 + $0x20] sm:$0xff]
    %v43 = vld [vmem:[%s0 + $0x28] sm:$0xff]
    %v44 = vld [vmem:[%s0 + $0x30] sm:$0xff]
    %v45 = vld [vmem:[%s0 + $0x38] sm:$0xff]
    %v46 = vld [vmem:[%s0 + $0x40] sm:$0xff]
    %v47 = vld [vmem:[%s0 + $0x48] sm:$0xff]
    %v48 = vld [vmem:[%s0 + $0x50] sm:$0xff]
    %v49 = vld [vmem:[%s0 + $0x58] sm:$0xff]
    %v50 = vld [vmem:[%s0 + $0x60] sm:$0xff]
    %v51 = vld [vmem:[%s0 + $0x68] sm:$0xff]
    %v52 = vld [vmem:[%s0 + $0x70] sm:$0xff]
    %v53 = vld [vmem:[%s0 + $0x78] sm:$0xff]
    %vm54 = vcmask 261120
    %v56 = vsel %vm54, %v22, 0
    %v59 = vsel %vm54, %v23, 0
    %v62 = vsel %vm54, %v24, 0
    %v65 = vsel %vm54, %v25, 0
    %v68 = vsel %vm54, %v26, 0
    %v71 = vsel %vm54, %v27, 0
    %v74 = vsel %vm54, %v28, 0
    %v77 = vsel %vm54, %v29, 0
    %v80 = vsel %vm54, %v30, 0
    %v83 = vsel %vm54, %v31, 0
    %v86 = vsel %vm54, %v32, 0
    %v89 = vsel %vm54, %v33, 0
    %v92 = vsel %vm54, %v34, 0
    %v95 = vsel %vm54, %v35, 0
    %v98 = vsel %vm54, %v36, 0
    %v101 = vsel %vm54, %v37, 0
    %v104 = vsel %vm54, %v38, 0
    %v107 = vsel %vm54, %v39, 0
    %v110 = vsel %vm54, %v40, 0
    %v113 = vsel %vm54, %v41, 0
    %v116 = vsel %vm54, %v42, 0
    %v119 = vsel %vm54, %v43, 0
    %v122 = vsel %vm54, %v44, 0
    %v125 = vsel %vm54, %v45, 0
    %v128 = vsel %vm54, %v46, 0
    %v131 = vsel %vm54, %v47, 0
    %v134 = vsel %vm54, %v48, 0
    %v137 = vsel %vm54, %v49, 0
    %v140 = vsel %vm54, %v50, 0
    %v143 = vsel %vm54, %v51, 0
    %v146 = vsel %vm54, %v52, 0
    %v149 = vsel %vm54, %v53, 0
    %151 = vmatprep.subr.mxu0 0.0
    %152 = vmatpush1.xpose.msra.mxu0 %v104
    %153 = vmatprep.subr.mxu0 0.0
    %154 = vmatpush1.xpose.msra.mxu0 %v107
    %155 = vmatprep.subr.mxu0 0.0
    %156 = vmatpush1.xpose.msra.mxu0 %v110
    %157 = vmatprep.subr.mxu0 0.0
    %158 = vmatpush1.xpose.msra.mxu0 %v113
    %159 = vmatprep.subr.mxu0 0.0
    %160 = vmatpush1.xpose.msra.mxu0 %v116
    %161 = vmatprep.subr.mxu0 0.0
    %162 = vmatpush1.xpose.msra.mxu0 %v119
    %163 = vmatprep.subr.mxu0 0.0
    %164 = vmatpush1.xpose.msra.mxu0 %v122
    %165 = vmatprep.subr.mxu0 0.0
    %166 = vmatpush1.xpose.msra.mxu0 %v125
    %167 = vmatprep.subr.mxu0 0.0
    %168 = vmatpush1.xpose.msra.mxu0 %v128
    %169 = vmatprep.subr.mxu0 0.0
    %170 = vmatpush1.xpose.msra.mxu0 %v131
    %171 = vmatprep.subr.mxu0 0.0
    %172 = vmatpush1.xpose.msra.mxu0 %v134
    %173 = vmatprep.subr.mxu0 0.0
    %174 = vmatpush1.xpose.msra.mxu0 %v137
    %175 = vmatprep.subr.mxu0 0.0
    %176 = vmatpush1.xpose.msra.mxu0 %v140
    %177 = vmatprep.subr.mxu0 0.0
    %178 = vmatpush1.xpose.msra.mxu0 %v143
    %179 = vmatprep.subr.mxu0 0.0
    %180 = vmatpush1.xpose.msra.mxu0 %v146
    %181 = vmatprep.subr.mxu0 0.0
    %182 = vmatpush1.xpose.msra.mxu0 %v149
    %183 = vmatprep.subr.mxu0 0.0
    %184 = vmatpush1.xpose.msra.mxu0 0.0
    %185 = vmatprep.subr.mxu0 0.0
    %186 = vmatpush1.xpose.msra.mxu0 0.0
    %187 = vmatprep.subr.mxu0 0.0
    %188 = vmatpush1.xpose.msra.mxu0 0.0
    %189 = vmatprep.subr.mxu0 0.0
    %190 = vmatpush1.xpose.msra.mxu0 0.0
    %191 = vmatprep.subr.mxu0 0.0
    %192 = vmatpush1.xpose.msra.mxu0 0.0
    %193 = vmatprep.subr.mxu0 0.0
    %194 = vmatpush1.xpose.msra.mxu0 0.0
    %195 = vmatprep.subr.mxu0 0.0
    %196 = vmatpush1.xpose.msra.mxu0 0.0
    %197 = vmatprep.subr.mxu0 0.0
    %198 = vmatpush1.xpose.msra.mxu0 0.0
    %199 = vmatprep.subr.mxu0 0.0
    %200 = vmatpush1.xpose.msra.mxu0 0.0
    %201 = vmatprep.subr.mxu0 0.0
    %202 = vmatpush1.xpose.msra.mxu0 0.0
    %203 = vmatprep.subr.mxu0 0.0
    %204 = vmatpush1.xpose.msra.mxu0 0.0
    %205 = vmatprep.subr.mxu0 0.0
    %206 = vmatpush1.xpose.msra.mxu0 0.0
    %207 = vmatprep.subr.mxu0 0.0
    %208 = vmatpush1.xpose.msra.mxu0 0.0
    %209 = vmatprep.subr.mxu0 0.0
    %210 = vmatpush1.xpose.msra.mxu0 0.0
    %211 = vmatprep.subr.mxu0 0.0
    %212 = vmatpush1.xpose.msra.mxu0 0.0
    %213 = vmatprep.subr.mxu0 0.0
    %214 = vmatpush1.xpose.msra.mxu0 0.0
    %215 = vmatprep.mubr.f32.mxu0 0.0
    %216 = vmatmul.mubr.f32.gmra.mrb[0].mxu0 %v56
    %v217 = vpop.f32.mrb[0].mxu0
    %v218 = vadd.f32 0.0, %v217
    %v219 = vpop.f32.mrb[0].mxu0
    %220 = vmatprep.mubr.f32.mxu0 0.0
    %221 = vmatmul.mubr.f32.gmra.mrb[0].mxu0 %v59
    %v222 = vpop.f32.mrb[0].mxu0
    %v223 = vadd.f32 0.0, %v222
    %v224 = vpop.f32.mrb[0].mxu0
    %225 = vmatprep.mubr.f32.mxu0 0.0
    %226 = vmatmul.mubr.f32.gmra.mrb[0].mxu0 %v62
    %v227 = vpop.f32.mrb[0].mxu0
    %v228 = vadd.f32 0.0, %v227
    %v229 = vpop.f32.mrb[0].mxu0
    %230 = vmatprep.mubr.f32.mxu0 0.0
    %231 = vmatmul.mubr.f32.gmra.mrb[0].mxu0 %v65
    %v232 = vpop.f32.mrb[0].mxu0
    %v233 = vadd.f32 0.0, %v232
    %v234 = vpop.f32.mrb[0].mxu0
    %235 = vmatprep.mubr.f32.mxu0 0.0
    %236 = vmatmul.mubr.f32.gmra.mrb[0].mxu0 %v68
    %v237 = vpop.f32.mrb[0].mxu0
    %v238 = vadd.f32 0.0, %v237
    %v239 = vpop.f32.mrb[0].mxu0
    %240 = vmatprep.mubr.f32.mxu0 0.0
    %241 = vmatmul.mubr.f32.gmra.mrb[0].mxu0 %v71
    %v242 = vpop.f32.mrb[0].mxu0
    %v243 = vadd.f32 0.0, %v242
    %v244 = vpop.f32.mrb[0].mxu0
    %245 = vmatprep.mubr.f32.mxu0 0.0
    %246 = vmatmul.mubr.f32.gmra.mrb[0].mxu0 %v74
    %v247 = vpop.f32.mrb[0].mxu0
    %v248 = vadd.f32 0.0, %v247
    %v249 = vpop.f32.mrb[0].mxu0
    %250 = vmatprep.mubr.f32.mxu0 0.0
    %251 = vmatmul.mubr.f32.gmra.mrb[0].mxu0 %v77
    %v252 = vpop.f32.mrb[0].mxu0
    %v253 = vadd.f32 0.0, %v252
    %v254 = vpop.f32.mrb[0].mxu0
    %255 = vmatprep.mubr.f32.mxu0 0.0
    %256 = vmatmul.mubr.f32.gmra.mrb[0].mxu0 %v80
    %v257 = vpop.f32.mrb[0].mxu0
    %v258 = vadd.f32 0.0, %v257
    %v259 = vpop.f32.mrb[0].mxu0
    %260 = vmatprep.mubr.f32.mxu0 0.0
    %261 = vmatmul.mubr.f32.gmra.mrb[0].mxu0 %v83
    %v262 = vpop.f32.mrb[0].mxu0
    %v263 = vadd.f32 0.0, %v262
    %v264 = vpop.f32.mrb[0].mxu0
    %265 = vmatprep.mubr.f32.mxu0 0.0
    %266 = vmatmul.mubr.f32.gmra.mrb[0].mxu0 %v86
    %v267 = vpop.f32.mrb[0].mxu0
    %v268 = vadd.f32 0.0, %v267
    %v269 = vpop.f32.mrb[0].mxu0
    %270 = vmatprep.mubr.f32.mxu0 0.0
    %271 = vmatmul.mubr.f32.gmra.mrb[0].mxu0 %v89
    %v272 = vpop.f32.mrb[0].mxu0
    %v273 = vadd.f32 0.0, %v272
    %v274 = vpop.f32.mrb[0].mxu0
    %275 = vmatprep.mubr.f32.mxu0 0.0
    %276 = vmatmul.mubr.f32.gmra.mrb[0].mxu0 %v92
    %v277 = vpop.f32.mrb[0].mxu0
    %v278 = vadd.f32 0.0, %v277
    %v279 = vpop.f32.mrb[0].mxu0
    %280 = vmatprep.mubr.f32.mxu0 0.0
    %281 = vmatmul.mubr.f32.gmra.mrb[0].mxu0 %v95
    %v282 = vpop.f32.mrb[0].mxu0
    %v283 = vadd.f32 0.0, %v282
    %v284 = vpop.f32.mrb[0].mxu0
    %285 = vmatprep.mubr.f32.mxu0 0.0
    %286 = vmatmul.mubr.f32.gmra.mrb[0].mxu0 %v98
    %v287 = vpop.f32.mrb[0].mxu0
    %v288 = vadd.f32 0.0, %v287
    %v289 = vpop.f32.mrb[0].mxu0
    %290 = vmatprep.mubr.f32.mxu0 0.0
    %291 = vmatmul.mubr.f32.gmra.mrb[0].mxu0 %v101
    %v292 = vpop.f32.mrb[0].mxu0
    %v293 = vadd.f32 0.0, %v292
    %v294 = vpop.f32.mrb[0].mxu0
    %295 = vdwg.mxu0
    %v296 = vand.u32 2147483647, %v218
    %v297 = vand.u32 2147483647, %v223
    %v298 = vand.u32 2147483647, %v228
    %v299 = vand.u32 2147483647, %v233
    %v300 = vand.u32 2147483647, %v238
    %v301 = vand.u32 2147483647, %v243
    %v302 = vand.u32 2147483647, %v248
    %v303 = vand.u32 2147483647, %v253
    %v304 = vand.u32 2147483647, %v258
    %v305 = vand.u32 2147483647, %v263
    %v306 = vand.u32 2147483647, %v268
    %v307 = vand.u32 2147483647, %v273
    %v308 = vand.u32 2147483647, %v278
    %v309 = vand.u32 2147483647, %v283
    %v310 = vand.u32 2147483647, %v288
    %v311 = vand.u32 2147483647, %v293
    %v312 = vmin.f32 %v296, 9.99999
    %v313 = vmin.f32 %v297, 9.99999
    %v314 = vmin.f32 %v298, 9.99999
    %v315 = vmin.f32 %v299, 9.99999
    %v316 = vmin.f32 %v300, 9.99999
    %v317 = vmin.f32 %v301, 9.99999
    %v318 = vmin.f32 %v302, 9.99999
    %v319 = vmin.f32 %v303, 9.99999
    %v320 = vmin.f32 %v304, 9.99999
    %v321 = vmin.f32 %v305, 9.99999
    %v322 = vmin.f32 %v306, 9.99999
    %v323 = vmin.f32 %v307, 9.99999
    %v324 = vmin.f32 %v308, 9.99999
    %v325 = vmin.f32 %v309, 9.99999
    %v326 = vmin.f32 %v310, 9.99999
    %v327 = vmin.f32 %v311, 9.99999
    %v328 = vsub.f32 %v312, 10.0
    %v329 = vsub.f32 %v313, 10.0
    %v330 = vsub.f32 %v314, 10.0
    %v331 = vsub.f32 %v315, 10.0
    %v332 = vsub.f32 %v316, 10.0
    %v333 = vsub.f32 %v317, 10.0
    %v334 = vsub.f32 %v318, 10.0
    %v335 = vsub.f32 %v319, 10.0
    %v336 = vsub.f32 %v320, 10.0
    %v337 = vsub.f32 %v321, 10.0
    %v338 = vsub.f32 %v322, 10.0
    %v339 = vsub.f32 %v323, 10.0
    %v340 = vsub.f32 %v324, 10.0
    %v341 = vsub.f32 %v325, 10.0
    %v342 = vsub.f32 %v326, 10.0
    %v343 = vsub.f32 %v327, 10.0
    %v344 = vmul.f32 %v328, 1.442695
    %v345 = vpow.pop %v344
    %v346 = vmul.f32 %v329, 1.442695
    %v347 = vpow.pop %v346
    %v348 = vmul.f32 %v330, 1.442695
    %v349 = vpow.pop %v348
    %v350 = vmul.f32 %v331, 1.442695
    %v351 = vpow.pop %v350
    %v352 = vmul.f32 %v332, 1.442695
    %v353 = vpow.pop %v352
    %v354 = vmul.f32 %v333, 1.442695
    %v355 = vpow.pop %v354
    %v356 = vmul.f32 %v334, 1.442695
    %v357 = vpow.pop %v356
    %v358 = vmul.f32 %v335, 1.442695
    %v359 = vpow.pop %v358
    %v360 = vmul.f32 %v336, 1.442695
    %v361 = vpow.pop %v360
    %v362 = vmul.f32 %v337, 1.442695
    %v363 = vpow.pop %v362
    %v364 = vmul.f32 %v338, 1.442695
    %v365 = vpow.pop %v364
    %v366 = vmul.f32 %v339, 1.442695
    %v367 = vpow.pop %v366
    %v368 = vmul.f32 %v340, 1.442695
    %v369 = vpow.pop %v368
    %v370 = vmul.f32 %v341, 1.442695
    %v371 = vpow.pop %v370
    %v372 = vmul.f32 %v342, 1.442695
    %v373 = vpow.pop %v372
    %v374 = vmul.f32 %v343, 1.442695
    %v375 = vpow.pop %v374
    %p376 = scmp.lt.s32.totalorder %s13, %s14
    %p377 = scmp.gt.s32.totalorder %s15, %s12
    %p378 = pnand %p376, %p377
    %p379 = pneg %p378
    %p380 = scmp.gt.s32.totalorder %s15, 16
    %p381 = por %p379, %p380
    // Predicated region
    $region14: #{tpu_custom_call.1} parent=1 // pred_check
      %p382 = pneg %p381
    $region15: #{tpu_custom_call.1} parent=1 // pred_check_branch
      %384 = sbr.rel (%p382) target = $region17
    $region16: #{tpu_custom_call.1} parent=1 // pred_region
      %v385 = vlaneseq
      %v386 = vshrl.u32 %v385, 7
      %v387 = vadd.s32 %v386, 8
      %v388 = vadd.s32 %v386, 16
      %v389 = vadd.s32 %v386, 24
      %v390 = vadd.s32 %v386, 32
      %v391 = vadd.s32 %v386, 40
      %v392 = vadd.s32 %v386, 48
      %v393 = vadd.s32 %v386, 56
      %v394 = vadd.s32 %v386, 64
      %v395 = vadd.s32 %v386, 72
      %v396 = vadd.s32 %v386, 80
      %v397 = vadd.s32 %v386, 88
      %v398 = vadd.s32 %v386, 96
      %v399 = vadd.s32 %v386, 104
      %v400 = vadd.s32 %v386, 112
      %v401 = vadd.s32 %v386, 120
      %v402 = vstv %s13
      %v403 = vadd.s32 %v386, %v402
      %v404 = vadd.s32 %v387, %v402
      %v405 = vadd.s32 %v388, %v402
      %v406 = vadd.s32 %v389, %v402
      %v407 = vadd.s32 %v390, %v402
      %v408 = vadd.s32 %v391, %v402
      %v409 = vadd.s32 %v392, %v402
      %v410 = vadd.s32 %v393, %v402
      %v411 = vadd.s32 %v394, %v402
      %v412 = vadd.s32 %v395, %v402
      %v413 = vadd.s32 %v396, %v402
      %v414 = vadd.s32 %v397, %v402
      %v415 = vadd.s32 %v398, %v402
      %v416 = vadd.s32 %v399, %v402
      %v417 = vadd.s32 %v400, %v402
      %v418 = vadd.s32 %v401, %v402
      %v419 = vlaneseq
      %v420 = vand.u32 %v419, 127
      %v421 = vstv %s12
      %v422 = vadd.s32 %v420, %v421
      %vm423 = vcmp.ne.s32.totalorder %v403, %v422
      %vm424 = vcmp.ne.s32.totalorder %v404, %v422
      %vm425 = vcmp.ne.s32.totalorder %v405, %v422
      %vm426 = vcmp.ne.s32.totalorder %v406, %v422
      %vm427 = vcmp.ne.s32.totalorder %v407, %v422
      %vm428 = vcmp.ne.s32.totalorder %v408, %v422
      %vm429 = vcmp.ne.s32.totalorder %v409, %v422
      %vm430 = vcmp.ne.s32.totalorder %v410, %v422
      %vm431 = vcmp.ne.s32.totalorder %v411, %v422
      %vm432 = vcmp.ne.s32.totalorder %v412, %v422
      %vm433 = vcmp.ne.s32.totalorder %v413, %v422
      %vm434 = vcmp.ne.s32.totalorder %v414, %v422
      %vm435 = vcmp.ne.s32.totalorder %v415, %v422
      %vm436 = vcmp.ne.s32.totalorder %v416, %v422
      %vm437 = vcmp.ne.s32.totalorder %v417, %v422
      %vm438 = vcmp.ne.s32.totalorder %v418, %v422
      %vm439 = vcmp.lt.s32.totalorder %v403, 16
      %vm440 = vcmp.lt.s32.totalorder %v404, 16
      %vm441 = vcmp.lt.s32.totalorder %v405, 16
      %vm442 = vcmp.lt.s32.totalorder %v406, 16
      %vm443 = vcmp.lt.s32.totalorder %v407, 16
      %vm444 = vcmp.lt.s32.totalorder %v408, 16
      %vm445 = vcmp.lt.s32.totalorder %v409, 16
      %vm446 = vcmp.lt.s32.totalorder %v410, 16
      %vm447 = vcmp.lt.s32.totalorder %v411, 16
      %vm448 = vcmp.lt.s32.totalorder %v412, 16
      %vm449 = vcmp.lt.s32.totalorder %v413, 16
      %vm450 = vcmp.lt.s32.totalorder %v414, 16
      %vm451 = vcmp.lt.s32.totalorder %v415, 16
      %vm452 = vcmp.lt.s32.totalorder %v416, 16
      %vm453 = vcmp.lt.s32.totalorder %v417, 16
      %vm454 = vcmp.lt.s32.totalorder %v418, 16
      %vm455 = vmand %vm423, %vm439
      %vm456 = vmand %vm424, %vm440
      %vm457 = vmand %vm425, %vm441
      %vm458 = vmand %vm426, %vm442
      %vm459 = vmand %vm427, %vm443
      %vm460 = vmand %vm428, %vm444
      %vm461 = vmand %vm429, %vm445
      %vm462 = vmand %vm430, %vm446
      %vm463 = vmand %vm431, %vm447
      %vm464 = vmand %vm432, %vm448
      %vm465 = vmand %vm433, %vm449
      %vm466 = vmand %vm434, %vm450
      %vm467 = vmand %vm435, %vm451
      %vm468 = vmand %vm436, %vm452
      %vm469 = vmand %vm437, %vm453
      %vm470 = vmand %vm438, %vm454
      %v471 = vld [vmem:[#allocation2] sm:$0x1]
      %v472 = vsel %vm455, %v345, 0.0
      %v473 = vsel %vm456, %v347, 0.0
      %v474 = vsel %vm457, %v349, 0.0
      %v475 = vsel %vm458, %v351, 0.0
      %v476 = vsel %vm459, %v353, 0.0
      %v477 = vsel %vm460, %v355, 0.0
      %v478 = vsel %vm461, %v357, 0.0
      %v479 = vsel %vm462, %v359, 0.0
      %v480 = vsel %vm463, %v361, 0.0
      %v481 = vsel %vm464, %v363, 0.0
      %v482 = vsel %vm465, %v365, 0.0
      %v483 = vsel %vm466, %v367, 0.0
      %v484 = vsel %vm467, %v369, 0.0
      %v485 = vsel %vm468, %v371, 0.0
      %v486 = vsel %vm469, %v373, 0.0
      %v487 = vsel %vm470, %v375, 0.0
      %v488 = vadd.f32 %v472, %v473
      %v489 = vadd.f32 %v488, %v474
      %v490 = vadd.f32 %v489, %v475
      %v491 = vadd.f32 %v490, %v476
      %v492 = vadd.f32 %v491, %v477
      %v493 = vadd.f32 %v492, %v478
      %v494 = vadd.f32 %v493, %v479
      %v495 = vadd.f32 %v494, %v480
      %v496 = vadd.f32 %v495, %v481
      %v497 = vadd.f32 %v496, %v482
      %v498 = vadd.f32 %v497, %v483
      %v499 = vadd.f32 %v498, %v484
      %v500 = vadd.f32 %v499, %v485
      %v501 = vadd.f32 %v500, %v486
      %v502 = vadd.f32 %v501, %v487
      %v503 = vrot.slane %v502, 4
      %v504 = vadd.f32 %v502, %v503
      %v505 = vrot.slane %v504, 2
      %v506 = vadd.f32 %v504, %v505
      %v507 = vrot.slane %v506, 1
      %v508 = vadd.f32 %v506, %v507
      %v509 = vadd.f32 %v471, %v508
      %510 = vst [vmem:[#allocation2] sm:$0x1] %v509
    $region17: #{tpu_custom_call.1} parent=1 // pred_fallthru
      _
    %p511 = pneg %p381
    // Predicated region
    $region18: #{tpu_custom_call.1} parent=1 // pred_check
      _
    $region19: #{tpu_custom_call.1} parent=1 // pred_check_branch
      %513 = sbr.rel (%p381) target = $region21
    $region20: #{tpu_custom_call.1} parent=1 // pred_region
      %v514 = vld [vmem:[#allocation2] sm:$0x1]
      %v515 = vadd.f32 %v345, %v347
      %v516 = vadd.f32 %v515, %v349
      %v517 = vadd.f32 %v516, %v351
      %v518 = vadd.f32 %v517, %v353
      %v519 = vadd.f32 %v518, %v355
      %v520 = vadd.f32 %v519, %v357
      %v521 = vadd.f32 %v520, %v359
      %v522 = vadd.f32 %v521, %v361
      %v523 = vadd.f32 %v522, %v363
      %v524 = vadd.f32 %v523, %v365
      %v525 = vadd.f32 %v524, %v367
      %v526 = vadd.f32 %v525, %v369
      %v527 = vadd.f32 %v526, %v371
      %v528 = vadd.f32 %v527, %v373
      %v529 = vadd.f32 %v528, %v375
      %v530 = vrot.slane %v529, 4
      %v531 = vadd.f32 %v529, %v530
      %v532 = vrot.slane %v531, 2
      %v533 = vadd.f32 %v531, %v532
      %v534 = vrot.slane %v533, 1
      %v535 = vadd.f32 %v533, %v534
      %v536 = vadd.f32 %v514, %v535
      %537 = vst [vmem:[#allocation2] sm:$0x1] %v536
    $region21: #{tpu_custom_call.1} parent=1 // pred_fallthru
      _
    %p538 = scmp.lt.s32.totalorder %s12, 8
    %p539 = scmp.lt.s32.totalorder %s14, 8
    %s540 = scalar_select %p539, %s14, 8
    %s541 = sadd.s32 %s540, 8
    %p542 = scmp.lt.s32.totalorder %s13, %s541
    %s543 = sadd.s32 %s12, 8
    %p544 = scmp.gt.s32.totalorder %s15, %s543
    %p545 = pnand %p542, %p544
    %p546 = pneg %p545
    %p547 = pnand %p538, %p546
    %p548 = pneg %p547
    %p549 = scmp.gt.s32.totalorder %s14, 8
    %p550 = scmp.lt.s32.totalorder %s12, 16
    %p551 = pnand %p549, %p550
    %p552 = pneg %p551
    %p553 = scmp.lt.s32.totalorder %s14, 16
    %s554 = scalar_select %p553, %s14, 16
    %s555 = ssub.s32 %s554, 8
    %p556 = scmp.lt.s32.totalorder %s13, %s555
    %p557 = scmp.gt.s32.totalorder %s12, 8
    %s558 = scalar_select %p557, %s12, 8
    %s559 = ssub.s32 %s558, 8
    %p560 = scmp.gt.s32.totalorder %s15, %s559
    %p561 = pnand %p556, %p560
    %p562 = pneg %p561
    %p563 = pnand %p552, %p562
    %p564 = pneg %p563
    %p565 = por %p548, %p564
    // Predicated region
    $region22: #{tpu_custom_call.1} parent=1 // pred_check
      %p566 = pneg %p565
    $region23: #{tpu_custom_call.1} parent=1 // pred_check_branch
      %568 = sbr.rel (%p566) target = $region25
    $region24: #{tpu_custom_call.1} parent=1 // pred_region
      %v569 = vlaneseq
      %v570 = vshrl.u32 %v569, 7
      %v571 = vadd.s32 %v570, 8
      %v572 = vadd.s32 %v570, 16
      %v573 = vadd.s32 %v570, 24
      %v574 = vadd.s32 %v570, 32
      %v575 = vadd.s32 %v570, 40
      %v576 = vadd.s32 %v570, 48
      %v577 = vadd.s32 %v570, 56
      %v578 = vadd.s32 %v570, 64
      %v579 = vadd.s32 %v570, 72
      %v580 = vadd.s32 %v570, 80
      %v581 = vadd.s32 %v570, 88
      %v582 = vadd.s32 %v570, 96
      %v583 = vadd.s32 %v570, 104
      %v584 = vadd.s32 %v570, 112
      %v585 = vadd.s32 %v570, 120
      %v586 = vstv %s13
      %v587 = vadd.s32 %v570, %v586
      %v588 = vadd.s32 %v571, %v586
      %v589 = vadd.s32 %v572, %v586
      %v590 = vadd.s32 %v573, %v586
      %v591 = vadd.s32 %v574, %v586
      %v592 = vadd.s32 %v575, %v586
      %v593 = vadd.s32 %v576, %v586
      %v594 = vadd.s32 %v577, %v586
      %v595 = vadd.s32 %v578, %v586
      %v596 = vadd.s32 %v579, %v586
      %v597 = vadd.s32 %v580, %v586
      %v598 = vadd.s32 %v581, %v586
      %v599 = vadd.s32 %v582, %v586
      %v600 = vadd.s32 %v583, %v586
      %v601 = vadd.s32 %v584, %v586
      %v602 = vadd.s32 %v585, %v586
      %v603 = vlaneseq
      %v604 = vand.u32 %v603, 127
      %v605 = vstv %s12
      %v606 = vadd.s32 %v604, %v605
      %vm607 = vcmp.lt.s32.totalorder %v606, 8
      %v608 = vsel %vm607, 8, 4294967288
      %v609 = vadd.s32 %v606, %v608
      %vm610 = vcmp.eq.s32.totalorder %v587, %v609
      %vm611 = vcmp.eq.s32.totalorder %v588, %v609
      %vm612 = vcmp.eq.s32.totalorder %v589, %v609
      %vm613 = vcmp.eq.s32.totalorder %v590, %v609
      %vm614 = vcmp.eq.s32.totalorder %v591, %v609
      %vm615 = vcmp.eq.s32.totalorder %v592, %v609
      %vm616 = vcmp.eq.s32.totalorder %v593, %v609
      %vm617 = vcmp.eq.s32.totalorder %v594, %v609
      %vm618 = vcmp.eq.s32.totalorder %v595, %v609
      %vm619 = vcmp.eq.s32.totalorder %v596, %v609
      %vm620 = vcmp.eq.s32.totalorder %v597, %v609
      %vm621 = vcmp.eq.s32.totalorder %v598, %v609
      %vm622 = vcmp.eq.s32.totalorder %v599, %v609
      %vm623 = vcmp.eq.s32.totalorder %v600, %v609
      %vm624 = vcmp.eq.s32.totalorder %v601, %v609
      %vm625 = vcmp.eq.s32.totalorder %v602, %v609
      %v626 = vld [vmem:[#allocation3] sm:$0x1]
      %v627 = vsel %vm610, %v312, 0.0
      %v628 = vsel %vm611, %v313, 0.0
      %v629 = vsel %vm612, %v314, 0.0
      %v630 = vsel %vm613, %v315, 0.0
      %v631 = vsel %vm614, %v316, 0.0
      %v632 = vsel %vm615, %v317, 0.0
      %v633 = vsel %vm616, %v318, 0.0
      %v634 = vsel %vm617, %v319, 0.0
      %v635 = vsel %vm618, %v320, 0.0
      %v636 = vsel %vm619, %v321, 0.0
      %v637 = vsel %vm620, %v322, 0.0
      %v638 = vsel %vm621, %v323, 0.0
      %v639 = vsel %vm622, %v324, 0.0
      %v640 = vsel %vm623, %v325, 0.0
      %v641 = vsel %vm624, %v326, 0.0
      %v642 = vsel %vm625, %v327, 0.0
      %v643 = vadd.f32 %v627, %v628
      %v644 = vadd.f32 %v643, %v629
      %v645 = vadd.f32 %v644, %v630
      %v646 = vadd.f32 %v645, %v631
      %v647 = vadd.f32 %v646, %v632
      %v648 = vadd.f32 %v647, %v633
      %v649 = vadd.f32 %v648, %v634
      %v650 = vadd.f32 %v649, %v635
      %v651 = vadd.f32 %v650, %v636
      %v652 = vadd.f32 %v651, %v637
      %v653 = vadd.f32 %v652, %v638
      %v654 = vadd.f32 %v653, %v639
      %v655 = vadd.f32 %v654, %v640
      %v656 = vadd.f32 %v655, %v641
      %v657 = vadd.f32 %v656, %v642
      %v658 = vrot.slane %v657, 4
      %v659 = vadd.f32 %v657, %v658
      %v660 = vrot.slane %v659, 2
      %v661 = vadd.f32 %v659, %v660
      %v662 = vrot.slane %v661, 1
      %v663 = vadd.f32 %v661, %v662
      %v664 = vadd.f32 %v626, %v663
      %665 = vst [vmem:[#allocation3] sm:$0x1] %v664
    $region25: #{tpu_custom_call.1} parent=1 // pred_fallthru
      _
    // Predicated region
    $region26: #{tpu_custom_call.1} parent=1 // pred_check
      %p666 = pneg %p16
    $region27: #{tpu_custom_call.1} parent=1 // pred_check_branch
      %668 = sbr.rel (%p666) target = $region29
    $region28: #{tpu_custom_call.1} parent=1 // pred_region
      %v669 = vld [vmem:[#allocation2] sm:$0x1]
      %v670 = vlog2.pop %v669
      %v671 = vmul.f32 %v670, 0.6931472
      %v672 = vadd.f32 %v671, 10.0
      %v673 = vld [vmem:[#allocation3] sm:$0x1]
      %v674 = vsub.f32 %v672, %v673
      %675 = vst [vmem:[#allocation4] sm:$0x1] %v674
    $region29: #{tpu_custom_call.1} parent=1 // pred_fallthru
      _
    // Predicated region
    $region30: #{tpu_custom_call.1} parent=1 // pred_check
      _
    $region31: #{tpu_custom_call.1} parent=1 // pred_check_branch
      %677 = sbr.rel (0) target = $region33
    $region32: #{tpu_custom_call.1} parent=1 // pred_region
      %s679 = ssub.s32 16, 16
      %680 = vsyncadd [#allocation5], %s679
      %s682 = sshll.u32 [#allocation4], 4
      %s683 = int_to_ptr.vmem [resolvable:$true] %s682
      %685 = dma.vmem_to_hbm [thread:$0]  %s683, 16, %s2, [#allocation5]
    $region33: #{tpu_custom_call.1} parent=1 // pred_fallthru
      _
    // Predicated region
    $region34: #{tpu_custom_call.1} parent=1 // pred_check
      _
    $region35: #{tpu_custom_call.1} parent=1 // pred_check_branch
      %687 = sbr.rel (0) target = $region37
    $region36: #{tpu_custom_call.1} parent=1 // pred_region
      %688 = dma.done [#allocation5], 16
    $region37: #{tpu_custom_call.1} parent=1 // pred_fallthru
      _
    %689 = vsyncpa [#allocation5], 1

</llo_original>
